<compile_context>
chip_gen: v6e
topology: v6e:2x2x1
jax: 0.10.0
libtpu: 0.0.40
codegen_flags: <defaults>
</compile_context>

<pallas_src>
import functools

import numpy as np
import jax
import jax.numpy as jnp
from jax import lax
from jax.experimental import pallas as pl
from jax.experimental.pallas import tpu as pltpu


# ---------------------------------------------------------------------------
# Kernel
# ---------------------------------------------------------------------------
def _conv2d_block_kernel(x_ref, w1_ref, b1_ref, w2_ref, b2_ref, o_ref,
                         xs_ref, ys_ref):
    # x_ref : (1, H, W*Cin)        one image; channels innermost on lane axis
    # w1_ref: (KH, W*Cin, W*Cout)  banded conv1 weight (BN1 scale folded in)
    # b1_ref: (1, W*Cout)          BN1 bias tiled across W
    # w2_ref: (KH, W*Cout, W*Cout) banded conv2 weight (BN2 scale folded in)
    # b2_ref: (1, W*Cout)          BN2 bias tiled across W
    # o_ref : (1, H, W*Cout)
    # xs_ref: (H+2, W*Cin)  VMEM scratch; rows 0 and H+1 are the zero row-halo
    # ys_ref: (H+2, W*Cout) VMEM scratch for the intermediate activation
    KH = w1_ref.shape[0]
    H = o_ref.shape[1]
    WCin = x_ref.shape[2]
    WCout = o_ref.shape[2]

    # ---------------- conv1 + BN1 + ReLU ----------------
    xs_ref[0:1, :] = jnp.zeros((1, WCin), jnp.float32)
    xs_ref[H + 1:H + 2, :] = jnp.zeros((1, WCin), jnp.float32)
    xs_ref[1:H + 1, :] = x_ref[0].astype(jnp.float32)

    acc = jnp.zeros((H, WCout), jnp.float32)
    for kh in range(KH):                      # static unroll -> 3 MXU matmuls
        acc = acc + jnp.dot(xs_ref[kh:kh + H, :], w1_ref[kh],
                            preferred_element_type=jnp.float32)
    y1 = jnp.maximum(acc + b1_ref[...], 0.0)  # folded BN bias + ReLU

    # Dropout2d: identity in eval mode.

    # ---------------- conv2 + BN2 + ReLU ----------------
    ys_ref[0:1, :] = jnp.zeros((1, WCout), jnp.float32)
    ys_ref[H + 1:H + 2, :] = jnp.zeros((1, WCout), jnp.float32)
    ys_ref[1:H + 1, :] = y1

    acc2 = jnp.zeros((H, WCout), jnp.float32)
    for kh in range(KH):
        acc2 = acc2 + jnp.dot(ys_ref[kh:kh + H, :], w2_ref[kh],
                              preferred_element_type=jnp.float32)
    y2 = jnp.maximum(acc2 + b2_ref[...], 0.0)

    o_ref[0] = y2.astype(o_ref.dtype)         # (16, 128) lane-dense store


def _conv2d_block_call(x_rows, B1, b1_row, B2, b2_row):
    N, H, WCin = x_rows.shape
    KH, _, WCout = B1.shape
    return pl.pallas_call(
        _conv2d_block_kernel,
        out_shape=jax.ShapeDtypeStruct((N, H, WCout), x_rows.dtype),
        grid_spec=pltpu.PrefetchScalarGridSpec(
            num_scalar_prefetch=0,
            grid=(N,),
            in_specs=[
                pl.BlockSpec((1, H, WCin), lambda n: (n, 0, 0)),
                pl.BlockSpec((KH, WCin, WCout), lambda n: (0, 0, 0)),
                pl.BlockSpec((1, WCout), lambda n: (0, 0)),
                pl.BlockSpec((KH, WCout, WCout), lambda n: (0, 0, 0)),
                pl.BlockSpec((1, WCout), lambda n: (0, 0)),
            ],
            out_specs=pl.BlockSpec((1, H, WCout), lambda n: (n, 0, 0)),
            scratch_shapes=[
                pltpu.VMEM((H + 2, WCin), jnp.float32),
                pltpu.VMEM((H + 2, WCout), jnp.float32),
            ],
        ),
        compiler_params=pltpu.CompilerParams(
            dimension_semantics=("parallel",)),
    )(x_rows, B1, b1_row, B2, b2_row)


# ---------------------------------------------------------------------------
# Wrapper: BN folding, banded-weight construction, layout plumbing
# ---------------------------------------------------------------------------
def _fold_bn(gamma, beta, mean, var, eps=1e-5):
    scale = gamma / jnp.sqrt(var + eps)
    bias = beta - mean * scale
    return scale.astype(jnp.float32), bias.astype(jnp.float32)


def _banded_weight(w_hwio, W):
    """Fold the horizontal (kw) taps of a 'same' conv into a banded matrix.

    B[kh, wi*Cin + ci, wo*Cout + co] = w[kh, kw, ci, co]  where wi = wo + kw - KW//2,
    with out-of-range horizontal taps dropped (== zero 'same' padding).
    Result shape: (KH, W*Cin, W*Cout).
    """
    KH, KW, Cin, Cout = w_hwio.shape
    band = np.zeros((KW, W, W), np.float32)
    for kw in range(KW):
        for wo in range(W):
            wi = wo + kw - KW // 2
            if 0 <= wi < W:
                band[kw, wi, wo] = 1.0
    B = jnp.einsum('kio,hkcd->hicod', jnp.asarray(band), w_hwio,
                   precision=jax.lax.Precision.HIGHEST)
    return B.reshape(KH, W * Cin, W * Cout)


def conv2d_block_forward(x_nchw, params):
    """Eval-mode forward of Conv2dBlock.  Input x is NCHW (PyTorch convention)."""
    N, Cin, H, W = x_nchw.shape
    w1, w2 = params["w1"], params["w2"]          # HWIO conv weights
    Cout = w1.shape[-1]

    s1, b1 = _fold_bn(params["gamma1"], params["beta1"],
                      params["mean1"], params["var1"])
    s2, b2 = _fold_bn(params["gamma2"], params["beta2"],
                      params["mean2"], params["var2"])

    B1 = _banded_weight(w1 * s1, W)              # (KH, W*Cin,  W*Cout), BN1 scale folded
    B2 = _banded_weight(w2 * s2, W)              # (KH, W*Cout, W*Cout), BN2 scale folded
    b1_row = jnp.tile(b1, W)[None, :]            # (1, W*Cout)
    b2_row = jnp.tile(b2, W)[None, :]            # (1, W*Cout)

    # NCHW -> (N, H, W*Cin): channels innermost on the 128-lane axis.
    x_rows = jnp.transpose(x_nchw, (0, 2, 3, 1)).reshape(N, H, W * Cin)

    out_rows = _conv2d_block_call(x_rows, B1, b1_row, B2, b2_row)  # (N, H, W*Cout)
    return jnp.transpose(out_rows.reshape(N, H, W, Cout), (0, 3, 1, 2))


# ---------------------------------------------------------------------------
# Pure-JAX reference (lax conv) for correctness checking
# ---------------------------------------------------------------------------
def _reference_forward(x_nchw, params):
    def conv_bn_relu_ref(x_nhwc, w, gamma, beta, mean, var, eps=1e-5):
        y = lax.conv_general_dilated(
            x_nhwc, w, window_strides=(1, 1), padding="SAME",
            dimension_numbers=("NHWC", "HWIO", "NHWC"))
        y = (y - mean) / jnp.sqrt(var + eps) * gamma + beta
        return jnp.maximum(y, 0.0)

    x = jnp.transpose(x_nchw, (0, 2, 3, 1))
    x = conv_bn_relu_ref(x, params["w1"], params["gamma1"], params["beta1"],
                         params["mean1"], params["var1"])
    x = conv_bn_relu_ref(x, params["w2"], params["gamma2"], params["beta2"],
                         params["mean2"], params["var2"])
    return jnp.transpose(x, (0, 3, 1, 2))


if __name__ == "__main__":
    in_channels, out_channels = 4, 8
    N, H, W = 2, 16, 16
    KH, KW = 3, 3

    key = jax.random.PRNGKey(0)
    keys = jax.random.split(key, 9)

    params = {
        # conv weights in HWIO layout (kh, kw, cin, cout)
        "w1": 0.1 * jax.random.normal(keys[0], (KH, KW, in_channels, out_channels),
                                      jnp.float32),
        "w2": 0.1 * jax.random.normal(keys[1], (KH, KW, out_channels, out_channels),
                                      jnp.float32),
        # bn1 params / running stats
        "gamma1": 1.0 + 0.1 * jax.random.normal(keys[2], (out_channels,), jnp.float32),
        "beta1": 0.1 * jax.random.normal(keys[3], (out_channels,), jnp.float32),
        "mean1": 0.05 * jax.random.normal(keys[4], (out_channels,), jnp.float32),
        "var1": 1.0 + 0.1 * jax.random.uniform(keys[5], (out_channels,), jnp.float32),
        # bn2 params / running stats
        "gamma2": 1.0 + 0.1 * jax.random.normal(keys[6], (out_channels,), jnp.float32),
        "beta2": 0.1 * jax.random.normal(keys[7], (out_channels,), jnp.float32),
        "mean2": 0.05 * jax.random.normal(keys[8], (out_channels,), jnp.float32),
        "var2": jnp.ones((out_channels,), jnp.float32),
    }

    x = jax.random.normal(jax.random.PRNGKey(42), (N, in_channels, H, W), jnp.float32)

    out = jax.block_until_ready(
        jax.jit(functools.partial(conv2d_block_forward, params=params))(x))

    ref = jax.block_until_ready(_reference_forward(x, params))
    assert out.shape == (N, out_channels, H, W), out.shape
    assert jnp.allclose(out, ref, atol=1e-4, rtol=1e-4), \
        float(jnp.max(jnp.abs(out - ref)))

    print("KERNEL_OK")
</pallas_src>

<mosaic_0001>
module attributes {stable_mosaic.version = 11 : i64} {
  func.func @_conv2d_block_kernel(%arg0: i32, %arg1: memref<1x16x64xf32, #tpu.memory_space<vmem>>, %arg2: memref<3x64x128xf32, #tpu.memory_space<vmem>>, %arg3: memref<1x128xf32, #tpu.memory_space<vmem>>, %arg4: memref<3x128x128xf32, #tpu.memory_space<vmem>>, %arg5: memref<1x128xf32, #tpu.memory_space<vmem>>, %arg6: memref<1x16x128xf32, #tpu.memory_space<vmem>>, %arg7: memref<18x64xf32, #tpu.memory_space<vmem>>, %arg8: memref<18x128xf32, #tpu.memory_space<vmem>>) attributes {dimension_semantics = [#tpu.dimension_semantics<parallel>], iteration_bounds = array<i64: 2>, scalar_prefetch = 0 : i64, scratch_operands = 2 : i64, tpu.core_type = #tpu.core_type<tc>, window_params = [{transform_indices = @transform_0, window_bounds = array<i64: 1, 16, 64>}, {pipeline_mode = #tpu.pipeline_mode<synchronous>, transform_indices = @transform_1, window_bounds = array<i64: 3, 64, 128>}, {pipeline_mode = #tpu.pipeline_mode<synchronous>, transform_indices = @transform_2, window_bounds = array<i64: 1, 128>}, {pipeline_mode = #tpu.pipeline_mode<synchronous>, transform_indices = @transform_3, window_bounds = array<i64: 3, 128, 128>}, {pipeline_mode = #tpu.pipeline_mode<synchronous>, transform_indices = @transform_4, window_bounds = array<i64: 1, 128>}, {transform_indices = @transform_5, window_bounds = array<i64: 1, 16, 128>}]} {
    %cst = arith.constant 0.000000e+00 : f32
    %0 = vector.broadcast %cst : f32 to vector<1x64xf32>
    %c0 = arith.constant 0 : index
    %c0_0 = arith.constant 0 : index
    %1 = vector.load %arg7[%c0, %c0_0] : memref<18x64xf32, #tpu.memory_space<vmem>>, vector<1x64xf32>
    tpu.vector_store %arg7[%c0, %c0_0], %0 {strides = array<i32>} : memref<18x64xf32, #tpu.memory_space<vmem>>, vector<1x64xf32>,
    %cst_1 = arith.constant 0.000000e+00 : f32
    %2 = vector.broadcast %cst_1 : f32 to vector<1x64xf32>
    %c17 = arith.constant 17 : index
    %c0_2 = arith.constant 0 : index
    %3 = vector.load %arg7[%c17, %c0_2] : memref<18x64xf32, #tpu.memory_space<vmem>>, vector<1x64xf32>
    tpu.vector_store %arg7[%c17, %c0_2], %2 {strides = array<i32>} : memref<18x64xf32, #tpu.memory_space<vmem>>, vector<1x64xf32>,
    %c0_3 = arith.constant 0 : index
    %c0_4 = arith.constant 0 : index
    %c0_5 = arith.constant 0 : index
    %4 = vector.load %arg1[%c0_3, %c0_4, %c0_5] : memref<1x16x64xf32, #tpu.memory_space<vmem>>, vector<1x16x64xf32>
    %5 = vector.shape_cast %4 : vector<1x16x64xf32> to vector<16x64xf32>
    %c1 = arith.constant 1 : index
    %c0_6 = arith.constant 0 : index
    %6 = vector.load %arg7[%c1, %c0_6] : memref<18x64xf32, #tpu.memory_space<vmem>>, vector<16x64xf32>
    tpu.vector_store %arg7[%c1, %c0_6], %5 {strides = array<i32>} : memref<18x64xf32, #tpu.memory_space<vmem>>, vector<16x64xf32>,
    %cst_7 = arith.constant 0.000000e+00 : f32
    %7 = vector.broadcast %cst_7 : f32 to vector<16x128xf32>
    %c0_8 = arith.constant 0 : index
    %c0_9 = arith.constant 0 : index
    %8 = vector.load %arg7[%c0_8, %c0_9] : memref<18x64xf32, #tpu.memory_space<vmem>>, vector<16x64xf32>
    %c0_10 = arith.constant 0 : index
    %c0_11 = arith.constant 0 : index
    %c0_12 = arith.constant 0 : index
    %9 = vector.load %arg2[%c0_10, %c0_11, %c0_12] : memref<3x64x128xf32, #tpu.memory_space<vmem>>, vector<1x64x128xf32>
    %10 = vector.shape_cast %9 : vector<1x64x128xf32> to vector<64x128xf32>
    %cst_13 = arith.constant dense<0.000000e+00> : vector<16x128xf32>
    %11 = tpu.matmul %8, %10, %cst_13 {dimension_numbers = #tpu.dot_dimension_numbers<[1], [0], [0], [1], [0, 0, 1, 1], [], []>} : vector<16x64xf32>, vector<64x128xf32>, vector<16x128xf32> -> vector<16x128xf32>
    %12 = arith.addf %7, %11 : vector<16x128xf32>
    %c1_14 = arith.constant 1 : index
    %c0_15 = arith.constant 0 : index
    %13 = vector.load %arg7[%c1_14, %c0_15] : memref<18x64xf32, #tpu.memory_space<vmem>>, vector<16x64xf32>
    %c1_16 = arith.constant 1 : index
    %c0_17 = arith.constant 0 : index
    %c0_18 = arith.constant 0 : index
    %14 = vector.load %arg2[%c1_16, %c0_17, %c0_18] : memref<3x64x128xf32, #tpu.memory_space<vmem>>, vector<1x64x128xf32>
    %15 = vector.shape_cast %14 : vector<1x64x128xf32> to vector<64x128xf32>
    %cst_19 = arith.constant dense<0.000000e+00> : vector<16x128xf32>
    %16 = tpu.matmul %13, %15, %cst_19 {dimension_numbers = #tpu.dot_dimension_numbers<[1], [0], [0], [1], [0, 0, 1, 1], [], []>} : vector<16x64xf32>, vector<64x128xf32>, vector<16x128xf32> -> vector<16x128xf32>
    %17 = arith.addf %12, %16 : vector<16x128xf32>
    %c2 = arith.constant 2 : index
    %c0_20 = arith.constant 0 : index
    %18 = vector.load %arg7[%c2, %c0_20] : memref<18x64xf32, #tpu.memory_space<vmem>>, vector<16x64xf32>
    %c2_21 = arith.constant 2 : index
    %c0_22 = arith.constant 0 : index
    %c0_23 = arith.constant 0 : index
    %19 = vector.load %arg2[%c2_21, %c0_22, %c0_23] : memref<3x64x128xf32, #tpu.memory_space<vmem>>, vector<1x64x128xf32>
    %20 = vector.shape_cast %19 : vector<1x64x128xf32> to vector<64x128xf32>
    %cst_24 = arith.constant dense<0.000000e+00> : vector<16x128xf32>
    %21 = tpu.matmul %18, %20, %cst_24 {dimension_numbers = #tpu.dot_dimension_numbers<[1], [0], [0], [1], [0, 0, 1, 1], [], []>} : vector<16x64xf32>, vector<64x128xf32>, vector<16x128xf32> -> vector<16x128xf32>
    %22 = arith.addf %17, %21 : vector<16x128xf32>
    %c0_25 = arith.constant 0 : index
    %c0_26 = arith.constant 0 : index
    %23 = vector.load %arg3[%c0_25, %c0_26] : memref<1x128xf32, #tpu.memory_space<vmem>>, vector<1x128xf32>
    %24 = vector.broadcast %23 : vector<1x128xf32> to vector<16x128xf32>
    %25 = arith.addf %22, %24 : vector<16x128xf32>
    %cst_27 = arith.constant 0.000000e+00 : f32
    %26 = vector.broadcast %cst_27 : f32 to vector<16x128xf32>
    %27 = arith.maximumf %25, %26 : vector<16x128xf32>
    %cst_28 = arith.constant 0.000000e+00 : f32
    %28 = vector.broadcast %cst_28 : f32 to vector<1x128xf32>
    %c0_29 = arith.constant 0 : index
    %c0_30 = arith.constant 0 : index
    %29 = vector.load %arg8[%c0_29, %c0_30] : memref<18x128xf32, #tpu.memory_space<vmem>>, vector<1x128xf32>
    tpu.vector_store %arg8[%c0_29, %c0_30], %28 {strides = array<i32>} : memref<18x128xf32, #tpu.memory_space<vmem>>, vector<1x128xf32>,
    %cst_31 = arith.constant 0.000000e+00 : f32
    %30 = vector.broadcast %cst_31 : f32 to vector<1x128xf32>
    %c17_32 = arith.constant 17 : index
    %c0_33 = arith.constant 0 : index
    %31 = vector.load %arg8[%c17_32, %c0_33] : memref<18x128xf32, #tpu.memory_space<vmem>>, vector<1x128xf32>
    tpu.vector_store %arg8[%c17_32, %c0_33], %30 {strides = array<i32>} : memref<18x128xf32, #tpu.memory_space<vmem>>, vector<1x128xf32>,
    %c1_34 = arith.constant 1 : index
    %c0_35 = arith.constant 0 : index
    %32 = vector.load %arg8[%c1_34, %c0_35] : memref<18x128xf32, #tpu.memory_space<vmem>>, vector<16x128xf32>
    tpu.vector_store %arg8[%c1_34, %c0_35], %27 {strides = array<i32>} : memref<18x128xf32, #tpu.memory_space<vmem>>, vector<16x128xf32>,
    %cst_36 = arith.constant 0.000000e+00 : f32
    %33 = vector.broadcast %cst_36 : f32 to vector<16x128xf32>
    %c0_37 = arith.constant 0 : index
    %c0_38 = arith.constant 0 : index
    %34 = vector.load %arg8[%c0_37, %c0_38] : memref<18x128xf32, #tpu.memory_space<vmem>>, vector<16x128xf32>
    %c0_39 = arith.constant 0 : index
    %c0_40 = arith.constant 0 : index
    %c0_41 = arith.constant 0 : index
    %35 = vector.load %arg4[%c0_39, %c0_40, %c0_41] : memref<3x128x128xf32, #tpu.memory_space<vmem>>, vector<1x128x128xf32>
    %36 = vector.shape_cast %35 : vector<1x128x128xf32> to vector<128x128xf32>
    %cst_42 = arith.constant dense<0.000000e+00> : vector<16x128xf32>
    %37 = tpu.matmul %34, %36, %cst_42 {dimension_numbers = #tpu.dot_dimension_numbers<[1], [0], [0], [1], [0, 0, 1, 1], [], []>} : vector<16x128xf32>, vector<128x128xf32>, vector<16x128xf32> -> vector<16x128xf32>
    %38 = arith.addf %33, %37 : vector<16x128xf32>
    %c1_43 = arith.constant 1 : index
    %c0_44 = arith.constant 0 : index
    %39 = vector.load %arg8[%c1_43, %c0_44] : memref<18x128xf32, #tpu.memory_space<vmem>>, vector<16x128xf32>
    %c1_45 = arith.constant 1 : index
    %c0_46 = arith.constant 0 : index
    %c0_47 = arith.constant 0 : index
    %40 = vector.load %arg4[%c1_45, %c0_46, %c0_47] : memref<3x128x128xf32, #tpu.memory_space<vmem>>, vector<1x128x128xf32>
    %41 = vector.shape_cast %40 : vector<1x128x128xf32> to vector<128x128xf32>
    %cst_48 = arith.constant dense<0.000000e+00> : vector<16x128xf32>
    %42 = tpu.matmul %39, %41, %cst_48 {dimension_numbers = #tpu.dot_dimension_numbers<[1], [0], [0], [1], [0, 0, 1, 1], [], []>} : vector<16x128xf32>, vector<128x128xf32>, vector<16x128xf32> -> vector<16x128xf32>
    %43 = arith.addf %38, %42 : vector<16x128xf32>
    %c2_49 = arith.constant 2 : index
    %c0_50 = arith.constant 0 : index
    %44 = vector.load %arg8[%c2_49, %c0_50] : memref<18x128xf32, #tpu.memory_space<vmem>>, vector<16x128xf32>
    %c2_51 = arith.constant 2 : index
    %c0_52 = arith.constant 0 : index
    %c0_53 = arith.constant 0 : index
    %45 = vector.load %arg4[%c2_51, %c0_52, %c0_53] : memref<3x128x128xf32, #tpu.memory_space<vmem>>, vector<1x128x128xf32>
    %46 = vector.shape_cast %45 : vector<1x128x128xf32> to vector<128x128xf32>
    %cst_54 = arith.constant dense<0.000000e+00> : vector<16x128xf32>
    %47 = tpu.matmul %44, %46, %cst_54 {dimension_numbers = #tpu.dot_dimension_numbers<[1], [0], [0], [1], [0, 0, 1, 1], [], []>} : vector<16x128xf32>, vector<128x128xf32>, vector<16x128xf32> -> vector<16x128xf32>
    %48 = arith.addf %43, %47 : vector<16x128xf32>
    %c0_55 = arith.constant 0 : index
    %c0_56 = arith.constant 0 : index
    %49 = vector.load %arg5[%c0_55, %c0_56] : memref<1x128xf32, #tpu.memory_space<vmem>>, vector<1x128xf32>
    %50 = vector.broadcast %49 : vector<1x128xf32> to vector<16x128xf32>
    %51 = arith.addf %48, %50 : vector<16x128xf32>
    %cst_57 = arith.constant 0.000000e+00 : f32
    %52 = vector.broadcast %cst_57 : f32 to vector<16x128xf32>
    %53 = arith.maximumf %51, %52 : vector<16x128xf32>
    %c0_58 = arith.constant 0 : index
    %c0_59 = arith.constant 0 : index
    %c0_60 = arith.constant 0 : index
    %54 = vector.load %arg6[%c0_58, %c0_59, %c0_60] : memref<1x16x128xf32, #tpu.memory_space<vmem>>, vector<1x16x128xf32>
    %55 = vector.shape_cast %54 : vector<1x16x128xf32> to vector<16x128xf32>
    %56 = vector.shape_cast %53 : vector<16x128xf32> to vector<1x16x128xf32>
    tpu.vector_store %arg6[%c0_58, %c0_59, %c0_60], %56 {strides = array<i32>} : memref<1x16x128xf32, #tpu.memory_space<vmem>>, vector<1x16x128xf32>,
    return
  }
  func.func @transform_0(%arg0: i32) -> (i32, i32, i32) {
    %c0_i32 = arith.constant 0 : i32
    %c0_i32_0 = arith.constant 0 : i32
    %c0_i32_1 = arith.constant 0 : i32
    return %arg0, %c0_i32, %c0_i32_0 : i32, i32, i32
  }
  func.func @transform_1(%arg0: i32) -> (i32, i32, i32) {
    %c0_i32 = arith.constant 0 : i32
    %c0_i32_0 = arith.constant 0 : i32
    %c0_i32_1 = arith.constant 0 : i32
    %c0_i32_2 = arith.constant 0 : i32
    return %c0_i32, %c0_i32_0, %c0_i32_1 : i32, i32, i32
  }
  func.func @transform_2(%arg0: i32) -> (i32, i32) {
    %c0_i32 = arith.constant 0 : i32
    %c0_i32_0 = arith.constant 0 : i32
    %c0_i32_1 = arith.constant 0 : i32
    return %c0_i32, %c0_i32_0 : i32, i32
  }
  func.func @transform_3(%arg0: i32) -> (i32, i32, i32) {
    %c0_i32 = arith.constant 0 : i32
    %c0_i32_0 = arith.constant 0 : i32
    %c0_i32_1 = arith.constant 0 : i32
    %c0_i32_2 = arith.constant 0 : i32
    return %c0_i32, %c0_i32_0, %c0_i32_1 : i32, i32, i32
  }
  func.func @transform_4(%arg0: i32) -> (i32, i32) {
    %c0_i32 = arith.constant 0 : i32
    %c0_i32_0 = arith.constant 0 : i32
    %c0_i32_1 = arith.constant 0 : i32
    return %c0_i32, %c0_i32_0 : i32, i32
  }
  func.func @transform_5(%arg0: i32) -> (i32, i32, i32) {
    %c0_i32 = arith.constant 0 : i32
    %c0_i32_0 = arith.constant 0 : i32
    %c0_i32_1 = arith.constant 0 : i32
    return %arg0, %c0_i32, %c0_i32_0 : i32, i32, i32
  }
}

</mosaic_0001>

<llo_original>
// kernel: tile.11
$region0: #{tile.11}
  %s0 = inlined_call_operand.vmem [shape: f32[16,8], index: 0, kind: input, shape index: {}]
  %s1 = inlined_call_operand.vmem [shape: f32[1,128], index: 1, kind: output, shape index: {}]
  $region1: #{tile.11} parent=0
    #allocation0 [shape = 'u8[4096]{0}', space=vmem, size = 0x1000, scoped, tag = 'scoped mem for output reshape']
    %v2 = vld [vmem:[%s0] sm:$0x1]
    %vm3 = vcmask 64512
    %4 = vst.msk [vmem:[#allocation0] sm:$0x1] %vm3, %v2
    %s5 = scalar_lea.vmem %s0, 15
    %v6 = vld [vmem:[%s5] sm:$0x1]
    %7 = vrot.lane.b32.xlu0 %v6, 120
    %v8 = vpop.permute.xlu0 %7
    %vm9 = vcmask 1048512
    %10 = vst.msk [vmem:[#allocation0] sm:$0x1] %vm9, %v8
    %s11 = scalar_lea.vmem %s0, 14
    %v12 = vld [vmem:[%s11] sm:$0x1]
    %13 = vrot.lane.b32.xlu0 %v12, 112
    %v14 = vpop.permute.xlu0 %13
    %vm15 = vcmask 982912
    %16 = vst.msk [vmem:[#allocation0] sm:$0x1] %vm15, %v14
    %s17 = scalar_lea.vmem %s0, 13
    %v18 = vld [vmem:[%s17] sm:$0x1]
    %19 = vrot.lane.b32.xlu0 %v18, 104
    %v20 = vpop.permute.xlu0 %19
    %vm21 = vcmask 917312
    %22 = vst.msk [vmem:[#allocation0] sm:$0x1] %vm21, %v20
    %s23 = scalar_lea.vmem %s0, 12
    %v24 = vld [vmem:[%s23] sm:$0x1]
    %25 = vrot.lane.b32.xlu0 %v24, 96
    %v26 = vpop.permute.xlu0 %25
    %vm27 = vcmask 851712
    %28 = vst.msk [vmem:[#allocation0] sm:$0x1] %vm27, %v26
    %s29 = scalar_lea.vmem %s0, 11
    %v30 = vld [vmem:[%s29] sm:$0x1]
    %31 = vrot.lane.b32.xlu0 %v30, 88
    %v32 = vpop.permute.xlu0 %31
    %vm33 = vcmask 786112
    %34 = vst.msk [vmem:[#allocation0] sm:$0x1] %vm33, %v32
    %s35 = scalar_lea.vmem %s0, 10
    %v36 = vld [vmem:[%s35] sm:$0x1]
    %37 = vrot.lane.b32.xlu0 %v36, 80
    %v38 = vpop.permute.xlu0 %37
    %vm39 = vcmask 720512
    %40 = vst.msk [vmem:[#allocation0] sm:$0x1] %vm39, %v38
    %s41 = scalar_lea.vmem %s0, 9
    %v42 = vld [vmem:[%s41] sm:$0x1]
    %43 = vrot.lane.b32.xlu0 %v42, 72
    %v44 = vpop.permute.xlu0 %43
    %vm45 = vcmask 654912
    %46 = vst.msk [vmem:[#allocation0] sm:$0x1] %vm45, %v44
    %s47 = scalar_lea.vmem %s0, 8
    %v48 = vld [vmem:[%s47] sm:$0x1]
    %49 = vrot.lane.b32.xlu0 %v48, 64
    %v50 = vpop.permute.xlu0 %49
    %vm51 = vcmask 589312
    %52 = vst.msk [vmem:[#allocation0] sm:$0x1] %vm51, %v50
    %s53 = scalar_lea.vmem %s0, 7
    %v54 = vld [vmem:[%s53] sm:$0x1]
    %55 = vrot.lane.b32.xlu0 %v54, 56
    %v56 = vpop.permute.xlu0 %55
    %vm57 = vcmask 523712
    %58 = vst.msk [vmem:[#allocation0] sm:$0x1] %vm57, %v56
    %s59 = scalar_lea.vmem %s0, 6
    %v60 = vld [vmem:[%s59] sm:$0x1]
    %61 = vrot.lane.b32.xlu0 %v60, 48
    %v62 = vpop.permute.xlu0 %61
    %vm63 = vcmask 458112
    %64 = vst.msk [vmem:[#allocation0] sm:$0x1] %vm63, %v62
    %s65 = scalar_lea.vmem %s0, 5
    %v66 = vld [vmem:[%s65] sm:$0x1]
    %67 = vrot.lane.b32.xlu0 %v66, 40
    %v68 = vpop.permute.xlu0 %67
    %vm69 = vcmask 392512
    %70 = vst.msk [vmem:[#allocation0] sm:$0x1] %vm69, %v68
    %s71 = scalar_lea.vmem %s0, 4
    %v72 = vld [vmem:[%s71] sm:$0x1]
    %73 = vrot.lane.b32.xlu0 %v72, 32
    %v74 = vpop.permute.xlu0 %73
    %vm75 = vcmask 326912
    %76 = vst.msk [vmem:[#allocation0] sm:$0x1] %vm75, %v74
    %s77 = scalar_lea.vmem %s0, 3
    %v78 = vld [vmem:[%s77] sm:$0x1]
    %79 = vrot.lane.b32.xlu0 %v78, 24
    %v80 = vpop.permute.xlu0 %79
    %vm81 = vcmask 261312
    %82 = vst.msk [vmem:[#allocation0] sm:$0x1] %vm81, %v80
    %s83 = scalar_lea.vmem %s0, 2
    %v84 = vld [vmem:[%s83] sm:$0x1]
    %85 = vrot.lane.b32.xlu0 %v84, 16
    %v86 = vpop.permute.xlu0 %85
    %vm87 = vcmask 195712
    %88 = vst.msk [vmem:[#allocation0] sm:$0x1] %vm87, %v86
    %s89 = scalar_lea.vmem %s0, 1
    %v90 = vld [vmem:[%s89] sm:$0x1]
    %91 = vrot.lane.b32.xlu0 %v90, 8
    %v92 = vpop.permute.xlu0 %91
    %vm93 = vcmask 130112
    %94 = vst.msk [vmem:[#allocation0] sm:$0x1] %vm93, %v92
    %s96 = sshll.u32 1, 1
    %s97 = ssub.s32 %s96, 1
    %v99 = vld [vmem:[#allocation0] sm:%s97]
    %s100 = sshll.u32 1, 1
    %s101 = ssub.s32 %s100, 1
    %102 = vst [vmem:[%s1] sm:%s101] %v99

// kernel: tile.10
$region0: #{tile.10}
  #allocation0 [shape = 's32[1]{0}', space=sflag, size = 0x4, scoped, tag = 'scoped memory for tile.10']
  %s0 = inlined_call_operand.vmem [shape: f32[8], index: 0, kind: input, shape index: {}]
  %s1 = inlined_call_operand.vmem [shape: f32[16,8], index: 1, kind: output, shape index: {}]
  // Predicated region
  $region2: #{tile.10} parent=0 // pred_check
    _
  $region3: #{tile.10} parent=0 // pred_check_branch
    %3 = sbr.rel (0) target = $region5
  $region4: #{tile.10} parent=0 // pred_region
    _
  $region5: #{tile.10} parent=0 // pred_fallthru
    _
  %v4 = vld [vmem:[%s0] ss:$0 sm:$0xff]
  %5 = vst [vmem:[%s1] sm:$0xff] %v4
  %s6 = scalar_lea.vmem %s1, 8
  %7 = vst [vmem:[%s6] sm:$0xff] %v4

// kernel: conv2d_block_forward.1
$region0: #{conv2d_block_forward.1}
  #allocation0 [shape = 'u32[]', space=smem, size = 0x4, offset = 0x4, fixed_abs, tag = 'smem constant byte address 0x4 - core index']
  #allocation1 [shape = 'u32[144,128]{1,0:T(1,128)}', space=vmem, size = 0x12000, scoped, tag = 'internal scratch']
  #allocation2 [shape = 'f32[18,64]{1,0:T(8,128)}', space=vmem, size = 0x3000, scoped, tag = 'scratch operand']
  #allocation3 [shape = 'f32[18,128]{1,0:T(8,128)}', space=vmem, size = 0x3000, scoped, tag = 'scratch operand']
  %s0 = inlined_call_operand.vmem [shape: f32[2,16,64], index: 0, kind: input, shape index: {}]
  %s1 = inlined_call_operand.hbm [shape: f32[3,64,128], index: 1, kind: input, shape index: {}]
  %s2 = inlined_call_operand.vmem [shape: f32[1,128], index: 2, kind: input, shape index: {}]
  %s3 = inlined_call_operand.vmem [shape: f32[3,128,128], index: 3, kind: input, shape index: {}]
  %s4 = inlined_call_operand.vmem [shape: f32[1,128], index: 4, kind: input, shape index: {}]
  %s5 = inlined_call_operand.vmem [shape: f32[2,16,128], index: 5, kind: output, shape index: {}]
  %s6 = sld [smem:[#allocation0]]
  $region57: #{conv2d_block_forward.1} parent=0
    _
  %s8 = ssub.s32 1, %s6
  %s9 = scalar_select 0, %s8, %s6
  $region1: #{conv2d_block_forward.1} parent=0
    #allocation4 [shape = 'u8[98304]{0}', space=vmem, size = 0x18000, scoped, tag = 'input window, operand 1, single buffered']
    #allocation5 [shape = 's32[2]{0}', space=sflag, size = 0x8, scoped, tag = 'scoped memory for conv2d_block_forward.1']
    %10 = vsyncpa [#allocation5], 0
    loop: start=0, step=1, limit=4
    $region2: #{conv2d_block_forward.1} parent=1 // loop_pre_header
      _
    $region3: #{conv2d_block_forward.1} parent=1 // loop_header
      %s12 = sphi 0, %s16
      %p13 = scmp.ge.s32.totalorder %s12, 4
      %s22 = sphi 0, %s24
      %s25 = sphi 0, %s22
      %s26 = sphi 0, %s25
      %s42 = sphi 0, %s26
      %s46 = sphi 0, %s46
      %s48 = sphi 0, %s46
      %s49 = sphi 0, %s48
      %s63 = sphi 0, %s49
      %s67 = sphi 0, %s67
      %s69 = sphi 0, %s67
      %s70 = sphi 0, %s69
      %s84 = sphi 0, %s70
      %s88 = sphi 0, %s88
      %s90 = sphi 0, %s88
      %s91 = sphi 0, %s90
      %s105 = sphi 0, %s91
      %s109 = sphi 0, %s109
      %s111 = sphi 0, %s109
      %s112 = sphi 0, %s111
      %s126 = sphi 0, %s112
      %s132 = sphi 0, %s134
      %s135 = sphi 0, %s132
      %s136 = sphi 0, %s135
      %s152 = sphi 0, %s136
    $region4: #{conv2d_block_forward.1} parent=1 // loop_header_branch
      %15 = sbr.rel (%p13) target = $region8
    $region5: #{conv2d_block_forward.1} parent=1 // loop_body
      %s17 = ssub.s32 %s12, 1
      %s18 = ssub.s32 %s12, 2
      %s19 = sadd.s32 %s12, 1
      %s20 = ssub.s32 %s12, %s19
      %p21 = scmp.eq.s32.totalorder %s20, 0
      %s23 = sadd.s32 %s22, 1
      %s24 = scalar_select %p21, %s22, %s23
      %p27 = pneg %p21
      %p28 = scmp.eq.s32.totalorder %s12, 1
      %p29 = por %p27, %p28
      %p30 = scmp.ne.s32.totalorder %s22, %s25
      %p31 = scmp.eq.s32.totalorder %s12, 0
      %p32 = por %p30, %p31
      %p33 = scmp.ne.s32.totalorder %s22, %s25
      %p34 = scmp.eq.s32.totalorder %s17, 1
      %p35 = por %p33, %p34
      %p36 = scmp.ne.s32.totalorder %s25, %s26
      %p37 = scmp.eq.s32.totalorder %s17, 0
      %p38 = por %p36, %p37
      %p39 = scmp.ne.s32.totalorder %s25, %s26
      %p40 = scmp.eq.s32.totalorder %s18, 1
      %p41 = por %p39, %p40
      %p43 = scmp.ne.s32.totalorder %s26, %s42
      %p44 = scmp.eq.s32.totalorder %s18, 0
      %p45 = por %p43, %p44
      %s47 = sadd.s32 %s46, 1
      %p50 = scmp.eq.s32.totalorder %s12, 1
      %p51 = scmp.ne.s32.totalorder %s46, %s48
      %p52 = scmp.eq.s32.totalorder %s12, 0
      %p53 = por %p51, %p52
      %p54 = scmp.ne.s32.totalorder %s46, %s48
      %p55 = scmp.eq.s32.totalorder %s17, 1
      %p56 = por %p54, %p55
      %p57 = scmp.ne.s32.totalorder %s48, %s49
      %p58 = scmp.eq.s32.totalorder %s17, 0
      %p59 = por %p57, %p58
      %p60 = scmp.ne.s32.totalorder %s48, %s49
      %p61 = scmp.eq.s32.totalorder %s18, 1
      %p62 = por %p60, %p61
      %p64 = scmp.ne.s32.totalorder %s49, %s63
      %p65 = scmp.eq.s32.totalorder %s18, 0
      %p66 = por %p64, %p65
      %s68 = sadd.s32 %s67, 1
      %p71 = scmp.eq.s32.totalorder %s12, 1
      %p72 = scmp.ne.s32.totalorder %s67, %s69
      %p73 = scmp.eq.s32.totalorder %s12, 0
      %p74 = por %p72, %p73
      %p75 = scmp.ne.s32.totalorder %s67, %s69
      %p76 = scmp.eq.s32.totalorder %s17, 1
      %p77 = por %p75, %p76
      %p78 = scmp.ne.s32.totalorder %s69, %s70
      %p79 = scmp.eq.s32.totalorder %s17, 0
      %p80 = por %p78, %p79
      %p81 = scmp.ne.s32.totalorder %s69, %s70
      %p82 = scmp.eq.s32.totalorder %s18, 1
      %p83 = por %p81, %p82
      %p85 = scmp.ne.s32.totalorder %s70, %s84
      %p86 = scmp.eq.s32.totalorder %s18, 0
      %p87 = por %p85, %p86
      %s89 = sadd.s32 %s88, 1
      %p92 = scmp.eq.s32.totalorder %s12, 1
      %p93 = scmp.ne.s32.totalorder %s88, %s90
      %p94 = scmp.eq.s32.totalorder %s12, 0
      %p95 = por %p93, %p94
      %p96 = scmp.ne.s32.totalorder %s88, %s90
      %p97 = scmp.eq.s32.totalorder %s17, 1
      %p98 = por %p96, %p97
      %p99 = scmp.ne.s32.totalorder %s90, %s91
      %p100 = scmp.eq.s32.totalorder %s17, 0
      %p101 = por %p99, %p100
      %p102 = scmp.ne.s32.totalorder %s90, %s91
      %p103 = scmp.eq.s32.totalorder %s18, 1
      %p104 = por %p102, %p103
      %p106 = scmp.ne.s32.totalorder %s91, %s105
      %p107 = scmp.eq.s32.totalorder %s18, 0
      %p108 = por %p106, %p107
      %s110 = sadd.s32 %s109, 1
      %p113 = scmp.eq.s32.totalorder %s12, 1
      %p114 = scmp.ne.s32.totalorder %s109, %s111
      %p115 = scmp.eq.s32.totalorder %s12, 0
      %p116 = por %p114, %p115
      %p117 = scmp.ne.s32.totalorder %s109, %s111
      %p118 = scmp.eq.s32.totalorder %s17, 1
      %p119 = por %p117, %p118
      %p120 = scmp.ne.s32.totalorder %s111, %s112
      %p121 = scmp.eq.s32.totalorder %s17, 0
      %p122 = por %p120, %p121
      %p123 = scmp.ne.s32.totalorder %s111, %s112
      %p124 = scmp.eq.s32.totalorder %s18, 1
      %p125 = por %p123, %p124
      %p127 = scmp.ne.s32.totalorder %s112, %s126
      %p128 = scmp.eq.s32.totalorder %s18, 0
      %p129 = por %p127, %p128
      %s130 = ssub.s32 %s12, %s19
      %p131 = scmp.eq.s32.totalorder %s130, 0
      %s133 = sadd.s32 %s132, 1
      %s134 = scalar_select %p131, %s132, %s133
      %p137 = pneg %p131
      %p138 = scmp.eq.s32.totalorder %s12, 1
      %p139 = por %p137, %p138
      %p140 = scmp.ne.s32.totalorder %s132, %s135
      %p141 = scmp.eq.s32.totalorder %s12, 0
      %p142 = por %p140, %p141
      %p143 = scmp.ne.s32.totalorder %s132, %s135
      %p144 = scmp.eq.s32.totalorder %s17, 1
      %p145 = por %p143, %p144
      %p146 = scmp.ne.s32.totalorder %s135, %s136
      %p147 = scmp.eq.s32.totalorder %s17, 0
      %p148 = por %p146, %p147
      %p149 = scmp.ne.s32.totalorder %s135, %s136
      %p150 = scmp.eq.s32.totalorder %s18, 1
      %p151 = por %p149, %p150
      %p153 = scmp.ne.s32.totalorder %s136, %s152
      %p154 = scmp.eq.s32.totalorder %s18, 0
      %p155 = por %p153, %p154
      %p156 = scmp.le.s32.totalorder 1, %s12
      %p157 = scmp.lt.s32.totalorder %s12, 3
      %p158 = pnand %p156, %p157
      %p159 = pneg %p158
      // Predicated region
      $region9: #{conv2d_block_forward.1} parent=5 // pred_check
        _
      $region10: #{conv2d_block_forward.1} parent=5 // pred_check_branch
        %161 = sbr.rel (%p158) target = $region12
      $region11: #{conv2d_block_forward.1} parent=5 // pred_region
        %s162 = ssub.s32 %s12, 1
        // Predicated region
        $region13: #{conv2d_block_forward.1} parent=11 // pred_check
          %p163 = pneg %p59
        $region14: #{conv2d_block_forward.1} parent=11 // pred_check_branch
          %165 = sbr.rel (%p163) target = $region16
        $region15: #{conv2d_block_forward.1} parent=11 // pred_region
          %s167 = ssub.s32 3072, 3072
          %168 = vsyncadd [#allocation5], %s167
          %s169 = sshll.u32 [#allocation4], 4
          %s170 = int_to_ptr.vmem [resolvable:$true] %s169
          %175 = dma.hbm_to_vmem [thread:$0]  %s1, 3072, %s170, [#allocation5], 128, 128, 8
        $region16: #{conv2d_block_forward.1} parent=11 // pred_fallthru
          _
        // Predicated region
        $region17: #{conv2d_block_forward.1} parent=11 // pred_check
          %p176 = pneg %p80
        $region18: #{conv2d_block_forward.1} parent=11 // pred_check_branch
          %178 = sbr.rel (%p176) target = $region20
        $region19: #{conv2d_block_forward.1} parent=11 // pred_region
          _
        $region20: #{conv2d_block_forward.1} parent=11 // pred_fallthru
          _
        // Predicated region
        $region21: #{conv2d_block_forward.1} parent=11 // pred_check
          %p179 = pneg %p101
        $region22: #{conv2d_block_forward.1} parent=11 // pred_check_branch
          %181 = sbr.rel (%p179) target = $region24
        $region23: #{conv2d_block_forward.1} parent=11 // pred_region
          _
        $region24: #{conv2d_block_forward.1} parent=11 // pred_fallthru
          _
        // Predicated region
        $region25: #{conv2d_block_forward.1} parent=11 // pred_check
          %p182 = pneg %p122
        $region26: #{conv2d_block_forward.1} parent=11 // pred_check_branch
          %184 = sbr.rel (%p182) target = $region28
        $region27: #{conv2d_block_forward.1} parent=11 // pred_region
          _
        $region28: #{conv2d_block_forward.1} parent=11 // pred_fallthru
          _
      $region12: #{conv2d_block_forward.1} parent=5 // pred_fallthru
        _
      %p185 = scmp.lt.s32.totalorder %s12, 2
      // Predicated region
      $region29: #{conv2d_block_forward.1} parent=5 // pred_check
        %p186 = pneg %p185
      $region30: #{conv2d_block_forward.1} parent=5 // pred_check_branch
        %188 = sbr.rel (%p186) target = $region32
      $region31: #{conv2d_block_forward.1} parent=5 // pred_region
        // Predicated region
        $region33: #{conv2d_block_forward.1} parent=31 // pred_check
          %p189 = pneg %p32
        $region34: #{conv2d_block_forward.1} parent=31 // pred_check_branch
          %191 = sbr.rel (%p189) target = $region36
        $region35: #{conv2d_block_forward.1} parent=31 // pred_region
          %p192 = scmp.lt.s32.totalorder %s12, 1
          %s193 = scalar_select %p192, %s12, 1
          %s194 = smul.addr %s193, 2
          %s195 = smul.addr %s194, 8
          %s196 = scalar_lea.vmem %s0, %s195
        $region36: #{conv2d_block_forward.1} parent=31 // pred_fallthru
          _
      $region32: #{conv2d_block_forward.1} parent=5 // pred_fallthru
        _
      %p197 = scmp.le.s32.totalorder 1, %s12
      %p198 = scmp.lt.s32.totalorder %s12, 3
      %p199 = pnand %p197, %p198
      %p200 = pneg %p199
      // Predicated region
      $region37: #{conv2d_block_forward.1} parent=5 // pred_check
        _
      $region38: #{conv2d_block_forward.1} parent=5 // pred_check_branch
        %202 = sbr.rel (%p199) target = $region40
      $region39: #{conv2d_block_forward.1} parent=5 // pred_region
        %s203 = ssub.s32 %s12, 1
        // Predicated region
        $region41: #{conv2d_block_forward.1} parent=39 // pred_check
          %p204 = pneg %p59
        $region42: #{conv2d_block_forward.1} parent=39 // pred_check_branch
          %206 = sbr.rel (%p204) target = $region44
        $region43: #{conv2d_block_forward.1} parent=39 // pred_region
          %207 = dma.done [#allocation5], 3072
        $region44: #{conv2d_block_forward.1} parent=39 // pred_fallthru
          _
        %p208 = scmp.lt.s32.totalorder %s17, 1
        %s209 = scalar_select %p208, %s17, 1
        %s210 = smul.addr %s209, 2
        %s211 = smul.addr %s210, 8
        %s212 = scalar_lea.vmem %s0, %s211
        %p213 = pneg %p38
        %p214 = pneg %p35
        %p215 = pneg %p59
        %p216 = pneg %p56
        %p217 = pneg %p80
        %p218 = pneg %p77
        %p219 = pneg %p101
        %p220 = pneg %p98
        %p221 = pneg %p122
        %p222 = pneg %p119
        %p223 = pneg %p148
        %p224 = pneg %p145
        %p225 = scmp.lt.s32.totalorder %s17, 1
        %s226 = scalar_select %p225, %s17, 1
        %s227 = smul.addr %s226, 2
        %s228 = smul.addr %s227, 8
        %s229 = scalar_lea.vmem %s5, %s228
        %p230 = scmp.lt.s32.totalorder %s17, 1
        %s231 = scalar_select %p230, %s17, 1
        %s232 = smul.addr %s231, 2
        %s233 = smul.addr %s232, 8
        %s234 = scalar_lea.vmem %s0, %s233
        %p235 = scmp.lt.s32.totalorder %s17, 1
        %s236 = scalar_select %p235, %s17, 1
        %s237 = smul.addr %s236, 2
        %s238 = smul.addr %s237, 8
        %s239 = scalar_lea.vmem %s5, %s238
        %vm240 = vcmask 516096
        %241 = vst.msk [vmem:[#allocation2] sm:$0x1] %vm240, 0.0
        %242 = vst.msk [vmem:[#allocation2 + $0x11] sm:$0x1] %vm240, 0.0
        %v243 = vld [vmem:[%s234] sm:$0xff]
        %v244 = vld [vmem:[%s234 + $0x8] sm:$0xff]
        %vm245 = vcmask 523264
        %246 = vst.msk [vmem:[#allocation2 + $0x1] sm:$0xff] %vm245, %v243
        %247 = vst.msk [vmem:[#allocation2 + $0x9] sm:$0xff] %vm245, %v244
        %v248 = vld [vmem:[#allocation2] sm:$0xff]
        %v249 = vld [vmem:[#allocation2 + $0x8] sm:$0xff]
        %v250 = vld [vmem:[#allocation4] sm:$0xff]
        %v251 = vld [vmem:[#allocation4 + $0x8] sm:$0xff]
        %v252 = vld [vmem:[#allocation4 + $0x10] sm:$0xff]
        %v253 = vld [vmem:[#allocation4 + $0x18] sm:$0xff]
        %v254 = vld [vmem:[#allocation4 + $0x20] sm:$0xff]
        %v255 = vld [vmem:[#allocation4 + $0x28] sm:$0xff]
        %v256 = vld [vmem:[#allocation4 + $0x30] sm:$0xff]
        %v257 = vld [vmem:[#allocation4 + $0x38] sm:$0xff]
        %v258 = vld [vmem:[#allocation2 + $0x1] sm:$0xff]
        %v259 = vld [vmem:[#allocation2 + $0x9] sm:$0xff]
        %s260 = scalar_lea.vmem [#allocation4], 64
        %v261 = vld [vmem:[%s260] sm:$0xff]
        %v262 = vld [vmem:[%s260 + $0x8] sm:$0xff]
        %v263 = vld [vmem:[%s260 + $0x10] sm:$0xff]
        %v264 = vld [vmem:[%s260 + $0x18] sm:$0xff]
        %v265 = vld [vmem:[%s260 + $0x20] sm:$0xff]
        %v266 = vld [vmem:[%s260 + $0x28] sm:$0xff]
        %v267 = vld [vmem:[%s260 + $0x30] sm:$0xff]
        %v268 = vld [vmem:[%s260 + $0x38] sm:$0xff]
        %v270 = vsel %vm245, %v258, 0
        %v273 = vsel %vm245, %v259, 0
        %275 = vmatprep.subr.mxu0 0.0
        %276 = vmatpush1.msra.mxu0 0.0
        %277 = vmatprep.subr.mxu0 0.0
        %278 = vmatpush1.msra.mxu0 0.0
        %279 = vmatprep.subr.mxu0 0.0
        %280 = vmatpush1.msra.mxu0 0.0
        %281 = vmatprep.subr.mxu0 0.0
        %282 = vmatpush1.msra.mxu0 0.0
        %283 = vmatprep.subr.mxu0 0.0
        %284 = vmatpush1.msra.mxu0 0.0
        %285 = vmatprep.subr.mxu0 0.0
        %286 = vmatpush1.msra.mxu0 0.0
        %287 = vmatprep.subr.mxu0 0.0
        %288 = vmatpush1.msra.mxu0 0.0
        %289 = vmatprep.subr.mxu0 0.0
        %290 = vmatpush1.msra.mxu0 0.0
        %291 = vmatprep.subr.mxu0 0.0
        %292 = vmatpush1.msra.mxu0 %v268
        %293 = vmatprep.subr.mxu0 0.0
        %294 = vmatpush1.msra.mxu0 %v267
        %295 = vmatprep.subr.mxu0 0.0
        %296 = vmatpush1.msra.mxu0 %v266
        %297 = vmatprep.subr.mxu0 0.0
        %298 = vmatpush1.msra.mxu0 %v265
        %299 = vmatprep.subr.mxu0 0.0
        %300 = vmatpush1.msra.mxu0 %v264
        %301 = vmatprep.subr.mxu0 0.0
        %302 = vmatpush1.msra.mxu0 %v263
        %303 = vmatprep.subr.mxu0 0.0
        %304 = vmatpush1.msra.mxu0 %v262
        %305 = vmatprep.subr.mxu0 0.0
        %306 = vmatpush1.msra.mxu0 %v261
        %307 = vmatprep.subr.mxu0 0.0
        %308 = vmatpush2.msra.mxu0 0.0
        %309 = vmatprep.subr.mxu0 0.0
        %310 = vmatpush2.msra.mxu0 0.0
        %311 = vmatprep.subr.mxu0 0.0
        %312 = vmatpush2.msra.mxu0 0.0
        %313 = vmatprep.subr.mxu0 0.0
        %314 = vmatpush2.msra.mxu0 0.0
        %315 = vmatprep.subr.mxu0 0.0
        %316 = vmatpush2.msra.mxu0 0.0
        %317 = vmatprep.subr.mxu0 0.0
        %318 = vmatpush2.msra.mxu0 0.0
        %319 = vmatprep.subr.mxu0 0.0
        %320 = vmatpush2.msra.mxu0 0.0
        %321 = vmatprep.subr.mxu0 0.0
        %322 = vmatpush2.msra.mxu0 0.0
        %323 = vmatprep.subr.mxu0 0.0
        %324 = vmatpush2.msra.mxu0 0.0
        %325 = vmatprep.subr.mxu0 0.0
        %326 = vmatpush2.msra.mxu0 0.0
        %327 = vmatprep.subr.mxu0 0.0
        %328 = vmatpush2.msra.mxu0 0.0
        %329 = vmatprep.subr.mxu0 0.0
        %330 = vmatpush2.msra.mxu0 0.0
        %331 = vmatprep.subr.mxu0 0.0
        %332 = vmatpush2.msra.mxu0 0.0
        %333 = vmatprep.subr.mxu0 0.0
        %334 = vmatpush2.msra.mxu0 0.0
        %335 = vmatprep.subr.mxu0 0.0
        %336 = vmatpush2.msra.mxu0 0.0
        %337 = vmatprep.subr.mxu0 0.0
        %338 = vmatpush2.msra.mxu0 0.0
        %339 = vmatprep.mubr.f32.mxu0 0.0
        %340 = vmatmul.mubr.f32.gmra.mxu0 %v270
        %v341 = vpop.f32.mrf.mxu0
        %v342 = vadd.f32 0.0, %v341
        %v343 = vpop.f32.mrf.mxu0
        %344 = vmatprep.mubr.f32.mxu0 0.0
        %345 = vmatmul.mubr.f32.gmra.mxu0 %v273
        %v346 = vpop.f32.mrf.mxu0
        %v347 = vadd.f32 0.0, %v346
        %v348 = vpop.f32.mrf.mxu0
        %349 = vdwg.mxu0
        %v351 = vsel %vm245, %v248, 0
        %v354 = vsel %vm245, %v249, 0
        %356 = vmatprep.subr.mxu0 0.0
        %357 = vmatpush1.msra.mxu0 0.0
        %358 = vmatprep.subr.mxu0 0.0
        %359 = vmatpush1.msra.mxu0 0.0
        %360 = vmatprep.subr.mxu0 0.0
        %361 = vmatpush1.msra.mxu0 0.0
        %362 = vmatprep.subr.mxu0 0.0
        %363 = vmatpush1.msra.mxu0 0.0
        %364 = vmatprep.subr.mxu0 0.0
        %365 = vmatpush1.msra.mxu0 0.0
        %366 = vmatprep.subr.mxu0 0.0
        %367 = vmatpush1.msra.mxu0 0.0
        %368 = vmatprep.subr.mxu0 0.0
        %369 = vmatpush1.msra.mxu0 0.0
        %370 = vmatprep.subr.mxu0 0.0
        %371 = vmatpush1.msra.mxu0 0.0
        %372 = vmatprep.subr.mxu0 0.0
        %373 = vmatpush1.msra.mxu0 %v257
        %374 = vmatprep.subr.mxu0 0.0
        %375 = vmatpush1.msra.mxu0 %v256
        %376 = vmatprep.subr.mxu0 0.0
        %377 = vmatpush1.msra.mxu0 %v255
        %378 = vmatprep.subr.mxu0 0.0
        %379 = vmatpush1.msra.mxu0 %v254
        %380 = vmatprep.subr.mxu0 0.0
        %381 = vmatpush1.msra.mxu0 %v253
        %382 = vmatprep.subr.mxu0 0.0
        %383 = vmatpush1.msra.mxu0 %v252
        %384 = vmatprep.subr.mxu0 0.0
        %385 = vmatpush1.msra.mxu0 %v251
        %386 = vmatprep.subr.mxu0 0.0
        %387 = vmatpush1.msra.mxu0 %v250
        %388 = vmatprep.subr.mxu0 0.0
        %389 = vmatpush2.msra.mxu0 0.0
        %390 = vmatprep.subr.mxu0 0.0
        %391 = vmatpush2.msra.mxu0 0.0
        %392 = vmatprep.subr.mxu0 0.0
        %393 = vmatpush2.msra.mxu0 0.0
        %394 = vmatprep.subr.mxu0 0.0
        %395 = vmatpush2.msra.mxu0 0.0
        %396 = vmatprep.subr.mxu0 0.0
        %397 = vmatpush2.msra.mxu0 0.0
        %398 = vmatprep.subr.mxu0 0.0
        %399 = vmatpush2.msra.mxu0 0.0
        %400 = vmatprep.subr.mxu0 0.0
        %401 = vmatpush2.msra.mxu0 0.0
        %402 = vmatprep.subr.mxu0 0.0
        %403 = vmatpush2.msra.mxu0 0.0
        %404 = vmatprep.subr.mxu0 0.0
        %405 = vmatpush2.msra.mxu0 0.0
        %406 = vmatprep.subr.mxu0 0.0
        %407 = vmatpush2.msra.mxu0 0.0
        %408 = vmatprep.subr.mxu0 0.0
        %409 = vmatpush2.msra.mxu0 0.0
        %410 = vmatprep.subr.mxu0 0.0
        %411 = vmatpush2.msra.mxu0 0.0
        %412 = vmatprep.subr.mxu0 0.0
        %413 = vmatpush2.msra.mxu0 0.0
        %414 = vmatprep.subr.mxu0 0.0
        %415 = vmatpush2.msra.mxu0 0.0
        %416 = vmatprep.subr.mxu0 0.0
        %417 = vmatpush2.msra.mxu0 0.0
        %418 = vmatprep.subr.mxu0 0.0
        %419 = vmatpush2.msra.mxu0 0.0
        %420 = vmatprep.mubr.f32.mxu0 0.0
        %421 = vmatmul.mubr.f32.gmra.mxu0 %v351
        %v422 = vpop.f32.mrf.mxu0
        %v423 = vadd.f32 %v342, %v422
        %v424 = vpop.f32.mrf.mxu0
        %425 = vmatprep.mubr.f32.mxu0 0.0
        %426 = vmatmul.mubr.f32.gmra.mxu0 %v354
        %v427 = vpop.f32.mrf.mxu0
        %v428 = vadd.f32 %v347, %v427
        %v429 = vpop.f32.mrf.mxu0
        %430 = vdwg.mxu0
        %v431 = vld [vmem:[#allocation2 + $0x2] sm:$0xff]
        %v432 = vld [vmem:[#allocation2 + $0xa] sm:$0xff]
        %s433 = scalar_lea.vmem [#allocation4], 128
        %v434 = vld [vmem:[%s433] sm:$0xff]
        %v435 = vld [vmem:[%s433 + $0x8] sm:$0xff]
        %v436 = vld [vmem:[%s433 + $0x10] sm:$0xff]
        %v437 = vld [vmem:[%s433 + $0x18] sm:$0xff]
        %v438 = vld [vmem:[%s433 + $0x20] sm:$0xff]
        %v439 = vld [vmem:[%s433 + $0x28] sm:$0xff]
        %v440 = vld [vmem:[%s433 + $0x30] sm:$0xff]
        %v441 = vld [vmem:[%s433 + $0x38] sm:$0xff]
        %v443 = vsel %vm245, %v431, 0
        %v446 = vsel %vm245, %v432, 0
        %448 = vmatprep.subr.mxu0 0.0
        %449 = vmatpush1.msra.mxu0 0.0
        %450 = vmatprep.subr.mxu0 0.0
        %451 = vmatpush1.msra.mxu0 0.0
        %452 = vmatprep.subr.mxu0 0.0
        %453 = vmatpush1.msra.mxu0 0.0
        %454 = vmatprep.subr.mxu0 0.0
        %455 = vmatpush1.msra.mxu0 0.0
        %456 = vmatprep.subr.mxu0 0.0
        %457 = vmatpush1.msra.mxu0 0.0
        %458 = vmatprep.subr.mxu0 0.0
        %459 = vmatpush1.msra.mxu0 0.0
        %460 = vmatprep.subr.mxu0 0.0
        %461 = vmatpush1.msra.mxu0 0.0
        %462 = vmatprep.subr.mxu0 0.0
        %463 = vmatpush1.msra.mxu0 0.0
        %464 = vmatprep.subr.mxu0 0.0
        %465 = vmatpush1.msra.mxu0 %v441
        %466 = vmatprep.subr.mxu0 0.0
        %467 = vmatpush1.msra.mxu0 %v440
        %468 = vmatprep.subr.mxu0 0.0
        %469 = vmatpush1.msra.mxu0 %v439
        %470 = vmatprep.subr.mxu0 0.0
        %471 = vmatpush1.msra.mxu0 %v438
        %472 = vmatprep.subr.mxu0 0.0
        %473 = vmatpush1.msra.mxu0 %v437
        %474 = vmatprep.subr.mxu0 0.0
        %475 = vmatpush1.msra.mxu0 %v436
        %476 = vmatprep.subr.mxu0 0.0
        %477 = vmatpush1.msra.mxu0 %v435
        %478 = vmatprep.subr.mxu0 0.0
        %479 = vmatpush1.msra.mxu0 %v434
        %480 = vmatprep.subr.mxu0 0.0
        %481 = vmatpush2.msra.mxu0 0.0
        %482 = vmatprep.subr.mxu0 0.0
        %483 = vmatpush2.msra.mxu0 0.0
        %484 = vmatprep.subr.mxu0 0.0
        %485 = vmatpush2.msra.mxu0 0.0
        %486 = vmatprep.subr.mxu0 0.0
        %487 = vmatpush2.msra.mxu0 0.0
        %488 = vmatprep.subr.mxu0 0.0
        %489 = vmatpush2.msra.mxu0 0.0
        %490 = vmatprep.subr.mxu0 0.0
        %491 = vmatpush2.msra.mxu0 0.0
        %492 = vmatprep.subr.mxu0 0.0
        %493 = vmatpush2.msra.mxu0 0.0
        %494 = vmatprep.subr.mxu0 0.0
        %495 = vmatpush2.msra.mxu0 0.0
        %496 = vmatprep.subr.mxu0 0.0
        %497 = vmatpush2.msra.mxu0 0.0
        %498 = vmatprep.subr.mxu0 0.0
        %499 = vmatpush2.msra.mxu0 0.0
        %500 = vmatprep.subr.mxu0 0.0
        %501 = vmatpush2.msra.mxu0 0.0
        %502 = vmatprep.subr.mxu0 0.0
        %503 = vmatpush2.msra.mxu0 0.0
        %504 = vmatprep.subr.mxu0 0.0
        %505 = vmatpush2.msra.mxu0 0.0
        %506 = vmatprep.subr.mxu0 0.0
        %507 = vmatpush2.msra.mxu0 0.0
        %508 = vmatprep.subr.mxu0 0.0
        %509 = vmatpush2.msra.mxu0 0.0
        %510 = vmatprep.subr.mxu0 0.0
        %511 = vmatpush2.msra.mxu0 0.0
        %512 = vmatprep.mubr.f32.mxu0 0.0
        %513 = vmatmul.mubr.f32.gmra.mxu0 %v443
        %v514 = vpop.f32.mrf.mxu0
        %v515 = vadd.f32 0.0, %v514
        %v516 = vpop.f32.mrf.mxu0
        %517 = vmatprep.mubr.f32.mxu0 0.0
        %518 = vmatmul.mubr.f32.gmra.mxu0 %v446
        %v519 = vpop.f32.mrf.mxu0
        %v520 = vadd.f32 0.0, %v519
        %v521 = vpop.f32.mrf.mxu0
        %522 = vdwg.mxu0
        %v523 = vadd.f32 %v423, %v515
        %v524 = vadd.f32 %v428, %v520
        %v525 = vld [vmem:[%s2] sm:$0x1]
        %v527 = vlaneseq
        %v528 = vshrl.u32 %v527, 7
        %v529 = vsub.s32 0, %v528
        %v530 = vrot.slane %v525, %v529
        %v532 = vadd.f32 %v523, %v530
        %v533 = vadd.f32 %v524, %v530
        %v534 = vmax.f32 %v532, 0.0
        %v535 = vmax.f32 %v533, 0.0
        %536 = vst [vmem:[#allocation3] sm:$0x1] 0.0
        %537 = vst [vmem:[#allocation3 + $0x11] sm:$0x1] 0.0
        %538 = vst [vmem:[#allocation3 + $0x1] sm:$0xff] %v534
        %539 = vst [vmem:[#allocation3 + $0x9] sm:$0xff] %v535
        %v540 = vld [vmem:[#allocation3] sm:$0xff]
        %v541 = vld [vmem:[#allocation3 + $0x8] sm:$0xff]
        %v542 = vld [vmem:[%s3] sm:$0xff]
        %v543 = vld [vmem:[%s3 + $0x8] sm:$0xff]
        %v544 = vld [vmem:[%s3 + $0x10] sm:$0xff]
        %v545 = vld [vmem:[%s3 + $0x18] sm:$0xff]
        %v546 = vld [vmem:[%s3 + $0x20] sm:$0xff]
        %v547 = vld [vmem:[%s3 + $0x28] sm:$0xff]
        %v548 = vld [vmem:[%s3 + $0x30] sm:$0xff]
        %v549 = vld [vmem:[%s3 + $0x38] sm:$0xff]
        %v550 = vld [vmem:[%s3 + $0x40] sm:$0xff]
        %v551 = vld [vmem:[%s3 + $0x48] sm:$0xff]
        %v552 = vld [vmem:[%s3 + $0x50] sm:$0xff]
        %v553 = vld [vmem:[%s3 + $0x58] sm:$0xff]
        %v554 = vld [vmem:[%s3 + $0x60] sm:$0xff]
        %v555 = vld [vmem:[%s3 + $0x68] sm:$0xff]
        %v556 = vld [vmem:[%s3 + $0x70] sm:$0xff]
        %v557 = vld [vmem:[%s3 + $0x78] sm:$0xff]
        %v558 = vld [vmem:[#allocation3 + $0x1] sm:$0xff]
        %v559 = vld [vmem:[#allocation3 + $0x9] sm:$0xff]
        %s560 = scalar_lea.vmem %s3, 128
        %v561 = vld [vmem:[%s560] sm:$0xff]
        %v562 = vld [vmem:[%s560 + $0x8] sm:$0xff]
        %v563 = vld [vmem:[%s560 + $0x10] sm:$0xff]
        %v564 = vld [vmem:[%s560 + $0x18] sm:$0xff]
        %v565 = vld [vmem:[%s560 + $0x20] sm:$0xff]
        %v566 = vld [vmem:[%s560 + $0x28] sm:$0xff]
        %v567 = vld [vmem:[%s560 + $0x30] sm:$0xff]
        %v568 = vld [vmem:[%s560 + $0x38] sm:$0xff]
        %v569 = vld [vmem:[%s560 + $0x40] sm:$0xff]
        %v570 = vld [vmem:[%s560 + $0x48] sm:$0xff]
        %v571 = vld [vmem:[%s560 + $0x50] sm:$0xff]
        %v572 = vld [vmem:[%s560 + $0x58] sm:$0xff]
        %v573 = vld [vmem:[%s560 + $0x60] sm:$0xff]
        %v574 = vld [vmem:[%s560 + $0x68] sm:$0xff]
        %v575 = vld [vmem:[%s560 + $0x70] sm:$0xff]
        %v576 = vld [vmem:[%s560 + $0x78] sm:$0xff]
        %577 = vmatprep.subr.mxu0 0.0
        %578 = vmatpush1.msra.mxu0 %v576
        %579 = vmatprep.subr.mxu0 0.0
        %580 = vmatpush1.msra.mxu0 %v575
        %581 = vmatprep.subr.mxu0 0.0
        %582 = vmatpush1.msra.mxu0 %v574
        %583 = vmatprep.subr.mxu0 0.0
        %584 = vmatpush1.msra.mxu0 %v573
        %585 = vmatprep.subr.mxu0 0.0
        %586 = vmatpush1.msra.mxu0 %v572
        %587 = vmatprep.subr.mxu0 0.0
        %588 = vmatpush1.msra.mxu0 %v571
        %589 = vmatprep.subr.mxu0 0.0
        %590 = vmatpush1.msra.mxu0 %v570
        %591 = vmatprep.subr.mxu0 0.0
        %592 = vmatpush1.msra.mxu0 %v569
        %593 = vmatprep.subr.mxu0 0.0
        %594 = vmatpush1.msra.mxu0 %v568
        %595 = vmatprep.subr.mxu0 0.0
        %596 = vmatpush1.msra.mxu0 %v567
        %597 = vmatprep.subr.mxu0 0.0
        %598 = vmatpush1.msra.mxu0 %v566
        %599 = vmatprep.subr.mxu0 0.0
        %600 = vmatpush1.msra.mxu0 %v565
        %601 = vmatprep.subr.mxu0 0.0
        %602 = vmatpush1.msra.mxu0 %v564
        %603 = vmatprep.subr.mxu0 0.0
        %604 = vmatpush1.msra.mxu0 %v563
        %605 = vmatprep.subr.mxu0 0.0
        %606 = vmatpush1.msra.mxu0 %v562
        %607 = vmatprep.subr.mxu0 0.0
        %608 = vmatpush1.msra.mxu0 %v561
        %609 = vmatprep.subr.mxu0 0.0
        %610 = vmatpush2.msra.mxu0 0.0
        %611 = vmatprep.subr.mxu0 0.0
        %612 = vmatpush2.msra.mxu0 0.0
        %613 = vmatprep.subr.mxu0 0.0
        %614 = vmatpush2.msra.mxu0 0.0
        %615 = vmatprep.subr.mxu0 0.0
        %616 = vmatpush2.msra.mxu0 0.0
        %617 = vmatprep.subr.mxu0 0.0
        %618 = vmatpush2.msra.mxu0 0.0
        %619 = vmatprep.subr.mxu0 0.0
        %620 = vmatpush2.msra.mxu0 0.0
        %621 = vmatprep.subr.mxu0 0.0
        %622 = vmatpush2.msra.mxu0 0.0
        %623 = vmatprep.subr.mxu0 0.0
        %624 = vmatpush2.msra.mxu0 0.0
        %625 = vmatprep.subr.mxu0 0.0
        %626 = vmatpush2.msra.mxu0 0.0
        %627 = vmatprep.subr.mxu0 0.0
        %628 = vmatpush2.msra.mxu0 0.0
        %629 = vmatprep.subr.mxu0 0.0
        %630 = vmatpush2.msra.mxu0 0.0
        %631 = vmatprep.subr.mxu0 0.0
        %632 = vmatpush2.msra.mxu0 0.0
        %633 = vmatprep.subr.mxu0 0.0
        %634 = vmatpush2.msra.mxu0 0.0
        %635 = vmatprep.subr.mxu0 0.0
        %636 = vmatpush2.msra.mxu0 0.0
        %637 = vmatprep.subr.mxu0 0.0
        %638 = vmatpush2.msra.mxu0 0.0
        %639 = vmatprep.subr.mxu0 0.0
        %640 = vmatpush2.msra.mxu0 0.0
        %641 = vmatprep.mubr.f32.mxu0 0.0
        %642 = vmatmul.mubr.f32.gmra.mxu0 %v558
        %v643 = vpop.f32.mrf.mxu0
        %v644 = vadd.f32 0.0, %v643
        %v645 = vpop.f32.mrf.mxu0
        %646 = vmatprep.mubr.f32.mxu0 0.0
        %647 = vmatmul.mubr.f32.gmra.mxu0 %v559
        %v648 = vpop.f32.mrf.mxu0
        %v649 = vadd.f32 0.0, %v648
        %v650 = vpop.f32.mrf.mxu0
        %651 = vdwg.mxu0
        %652 = vmatprep.subr.mxu0 0.0
        %653 = vmatpush1.msra.mxu0 %v557
        %654 = vmatprep.subr.mxu0 0.0
        %655 = vmatpush1.msra.mxu0 %v556
        %656 = vmatprep.subr.mxu0 0.0
        %657 = vmatpush1.msra.mxu0 %v555
        %658 = vmatprep.subr.mxu0 0.0
        %659 = vmatpush1.msra.mxu0 %v554
        %660 = vmatprep.subr.mxu0 0.0
        %661 = vmatpush1.msra.mxu0 %v553
        %662 = vmatprep.subr.mxu0 0.0
        %663 = vmatpush1.msra.mxu0 %v552
        %664 = vmatprep.subr.mxu0 0.0
        %665 = vmatpush1.msra.mxu0 %v551
        %666 = vmatprep.subr.mxu0 0.0
        %667 = vmatpush1.msra.mxu0 %v550
        %668 = vmatprep.subr.mxu0 0.0
        %669 = vmatpush1.msra.mxu0 %v549
        %670 = vmatprep.subr.mxu0 0.0
        %671 = vmatpush1.msra.mxu0 %v548
        %672 = vmatprep.subr.mxu0 0.0
        %673 = vmatpush1.msra.mxu0 %v547
        %674 = vmatprep.subr.mxu0 0.0
        %675 = vmatpush1.msra.mxu0 %v546
        %676 = vmatprep.subr.mxu0 0.0
        %677 = vmatpush1.msra.mxu0 %v545
        %678 = vmatprep.subr.mxu0 0.0
        %679 = vmatpush1.msra.mxu0 %v544
        %680 = vmatprep.subr.mxu0 0.0
        %681 = vmatpush1.msra.mxu0 %v543
        %682 = vmatprep.subr.mxu0 0.0
        %683 = vmatpush1.msra.mxu0 %v542
        %684 = vmatprep.subr.mxu0 0.0
        %685 = vmatpush2.msra.mxu0 0.0
        %686 = vmatprep.subr.mxu0 0.0
        %687 = vmatpush2.msra.mxu0 0.0
        %688 = vmatprep.subr.mxu0 0.0
        %689 = vmatpush2.msra.mxu0 0.0
        %690 = vmatprep.subr.mxu0 0.0
        %691 = vmatpush2.msra.mxu0 0.0
        %692 = vmatprep.subr.mxu0 0.0
        %693 = vmatpush2.msra.mxu0 0.0
        %694 = vmatprep.subr.mxu0 0.0
        %695 = vmatpush2.msra.mxu0 0.0
        %696 = vmatprep.subr.mxu0 0.0
        %697 = vmatpush2.msra.mxu0 0.0
        %698 = vmatprep.subr.mxu0 0.0
        %699 = vmatpush2.msra.mxu0 0.0
        %700 = vmatprep.subr.mxu0 0.0
        %701 = vmatpush2.msra.mxu0 0.0
        %702 = vmatprep.subr.mxu0 0.0
        %703 = vmatpush2.msra.mxu0 0.0
        %704 = vmatprep.subr.mxu0 0.0
        %705 = vmatpush2.msra.mxu0 0.0
        %706 = vmatprep.subr.mxu0 0.0
        %707 = vmatpush2.msra.mxu0 0.0
        %708 = vmatprep.subr.mxu0 0.0
        %709 = vmatpush2.msra.mxu0 0.0
        %710 = vmatprep.subr.mxu0 0.0
        %711 = vmatpush2.msra.mxu0 0.0
        %712 = vmatprep.subr.mxu0 0.0
        %713 = vmatpush2.msra.mxu0 0.0
        %714 = vmatprep.subr.mxu0 0.0
        %715 = vmatpush2.msra.mxu0 0.0
        %716 = vmatprep.mubr.f32.mxu0 0.0
        %717 = vmatmul.mubr.f32.gmra.mxu0 %v540
        %v718 = vpop.f32.mrf.mxu0
        %v719 = vadd.f32 %v644, %v718
        %v720 = vpop.f32.mrf.mxu0
        %721 = vmatprep.mubr.f32.mxu0 0.0
        %722 = vmatmul.mubr.f32.gmra.mxu0 %v541
        %v723 = vpop.f32.mrf.mxu0
        %v724 = vadd.f32 %v649, %v723
        %v725 = vpop.f32.mrf.mxu0
        %726 = vdwg.mxu0
        %v727 = vld [vmem:[#allocation3 + $0x2] sm:$0xff]
        %v728 = vld [vmem:[#allocation3 + $0xa] sm:$0xff]
        %s729 = scalar_lea.vmem %s3, 256
        %v730 = vld [vmem:[%s729] sm:$0xff]
        %v731 = vld [vmem:[%s729 + $0x8] sm:$0xff]
        %v732 = vld [vmem:[%s729 + $0x10] sm:$0xff]
        %v733 = vld [vmem:[%s729 + $0x18] sm:$0xff]
        %v734 = vld [vmem:[%s729 + $0x20] sm:$0xff]
        %v735 = vld [vmem:[%s729 + $0x28] sm:$0xff]
        %v736 = vld [vmem:[%s729 + $0x30] sm:$0xff]
        %v737 = vld [vmem:[%s729 + $0x38] sm:$0xff]
        %v738 = vld [vmem:[%s729 + $0x40] sm:$0xff]
        %v739 = vld [vmem:[%s729 + $0x48] sm:$0xff]
        %v740 = vld [vmem:[%s729 + $0x50] sm:$0xff]
        %v741 = vld [vmem:[%s729 + $0x58] sm:$0xff]
        %v742 = vld [vmem:[%s729 + $0x60] sm:$0xff]
        %v743 = vld [vmem:[%s729 + $0x68] sm:$0xff]
        %v744 = vld [vmem:[%s729 + $0x70] sm:$0xff]
        %v745 = vld [vmem:[%s729 + $0x78] sm:$0xff]
        %746 = vmatprep.subr.mxu0 0.0
        %747 = vmatpush1.msra.mxu0 %v745
        %748 = vmatprep.subr.mxu0 0.0
        %749 = vmatpush1.msra.mxu0 %v744
        %750 = vmatprep.subr.mxu0 0.0
        %751 = vmatpush1.msra.mxu0 %v743
        %752 = vmatprep.subr.mxu0 0.0
        %753 = vmatpush1.msra.mxu0 %v742
        %754 = vmatprep.subr.mxu0 0.0
        %755 = vmatpush1.msra.mxu0 %v741
        %756 = vmatprep.subr.mxu0 0.0
        %757 = vmatpush1.msra.mxu0 %v740
        %758 = vmatprep.subr.mxu0 0.0
        %759 = vmatpush1.msra.mxu0 %v739
        %760 = vmatprep.subr.mxu0 0.0
        %761 = vmatpush1.msra.mxu0 %v738
        %762 = vmatprep.subr.mxu0 0.0
        %763 = vmatpush1.msra.mxu0 %v737
        %764 = vmatprep.subr.mxu0 0.0
        %765 = vmatpush1.msra.mxu0 %v736
        %766 = vmatprep.subr.mxu0 0.0
        %767 = vmatpush1.msra.mxu0 %v735
        %768 = vmatprep.subr.mxu0 0.0
        %769 = vmatpush1.msra.mxu0 %v734
        %770 = vmatprep.subr.mxu0 0.0
        %771 = vmatpush1.msra.mxu0 %v733
        %772 = vmatprep.subr.mxu0 0.0
        %773 = vmatpush1.msra.mxu0 %v732
        %774 = vmatprep.subr.mxu0 0.0
        %775 = vmatpush1.msra.mxu0 %v731
        %776 = vmatprep.subr.mxu0 0.0
        %777 = vmatpush1.msra.mxu0 %v730
        %778 = vmatprep.subr.mxu0 0.0
        %779 = vmatpush2.msra.mxu0 0.0
        %780 = vmatprep.subr.mxu0 0.0
        %781 = vmatpush2.msra.mxu0 0.0
        %782 = vmatprep.subr.mxu0 0.0
        %783 = vmatpush2.msra.mxu0 0.0
        %784 = vmatprep.subr.mxu0 0.0
        %785 = vmatpush2.msra.mxu0 0.0
        %786 = vmatprep.subr.mxu0 0.0
        %787 = vmatpush2.msra.mxu0 0.0
        %788 = vmatprep.subr.mxu0 0.0
        %789 = vmatpush2.msra.mxu0 0.0
        %790 = vmatprep.subr.mxu0 0.0
        %791 = vmatpush2.msra.mxu0 0.0
        %792 = vmatprep.subr.mxu0 0.0
        %793 = vmatpush2.msra.mxu0 0.0
        %794 = vmatprep.subr.mxu0 0.0
        %795 = vmatpush2.msra.mxu0 0.0
        %796 = vmatprep.subr.mxu0 0.0
        %797 = vmatpush2.msra.mxu0 0.0
        %798 = vmatprep.subr.mxu0 0.0
        %799 = vmatpush2.msra.mxu0 0.0
        %800 = vmatprep.subr.mxu0 0.0
        %801 = vmatpush2.msra.mxu0 0.0
        %802 = vmatprep.subr.mxu0 0.0
        %803 = vmatpush2.msra.mxu0 0.0
        %804 = vmatprep.subr.mxu0 0.0
        %805 = vmatpush2.msra.mxu0 0.0
        %806 = vmatprep.subr.mxu0 0.0
        %807 = vmatpush2.msra.mxu0 0.0
        %808 = vmatprep.subr.mxu0 0.0
        %809 = vmatpush2.msra.mxu0 0.0
        %810 = vmatprep.mubr.f32.mxu0 0.0
        %811 = vmatmul.mubr.f32.gmra.mxu0 %v727
        %v812 = vpop.f32.mrf.mxu0
        %v813 = vadd.f32 0.0, %v812
        %v814 = vpop.f32.mrf.mxu0
        %815 = vmatprep.mubr.f32.mxu0 0.0
        %816 = vmatmul.mubr.f32.gmra.mxu0 %v728
        %v817 = vpop.f32.mrf.mxu0
        %v818 = vadd.f32 0.0, %v817
        %v819 = vpop.f32.mrf.mxu0
        %820 = vdwg.mxu0
        %v821 = vadd.f32 %v719, %v813
        %v822 = vadd.f32 %v724, %v818
        %v823 = vld [vmem:[%s4] sm:$0x1]
        %v825 = vlaneseq
        %v826 = vshrl.u32 %v825, 7
        %v827 = vsub.s32 0, %v826
        %v828 = vrot.slane %v823, %v827
        %v830 = vadd.f32 %v821, %v828
        %v831 = vadd.f32 %v822, %v828
        %v832 = vmax.f32 %v830, 0.0
        %v833 = vmax.f32 %v831, 0.0
        %834 = vst [vmem:[%s239] sm:$0xff] %v832
        %835 = vst [vmem:[%s239 + $0x8] sm:$0xff] %v833
        %p836 = scmp.lt.s32.totalorder %s17, 1
        %s837 = scalar_select %p836, %s17, 1
        %s838 = smul.addr %s837, 2
        %s839 = smul.addr %s838, 8
        %s840 = scalar_lea.vmem %s5, %s839
        // Predicated region
        $region45: #{conv2d_block_forward.1} parent=39 // pred_check
          %p841 = pneg %p145
        $region46: #{conv2d_block_forward.1} parent=39 // pred_check_branch
          %843 = sbr.rel (%p841) target = $region48
        $region47: #{conv2d_block_forward.1} parent=39 // pred_region
          _
        $region48: #{conv2d_block_forward.1} parent=39 // pred_fallthru
          _
      $region40: #{conv2d_block_forward.1} parent=5 // pred_fallthru
        _
      %p844 = scmp.le.s32.totalorder 2, %s12
      // Predicated region
      $region49: #{conv2d_block_forward.1} parent=5 // pred_check
        %p845 = pneg %p844
      $region50: #{conv2d_block_forward.1} parent=5 // pred_check_branch
        %847 = sbr.rel (%p845) target = $region52
      $region51: #{conv2d_block_forward.1} parent=5 // pred_region
        %s848 = ssub.s32 %s12, 2
        // Predicated region
        $region53: #{conv2d_block_forward.1} parent=51 // pred_check
          %p849 = pneg %p151
        $region54: #{conv2d_block_forward.1} parent=51 // pred_check_branch
          %851 = sbr.rel (%p849) target = $region56
        $region55: #{conv2d_block_forward.1} parent=51 // pred_region
          %p852 = scmp.lt.s32.totalorder %s18, 1
          %s853 = scalar_select %p852, %s18, 1
          %s854 = smul.addr %s853, 2
          %s855 = smul.addr %s854, 8
          %s856 = scalar_lea.vmem %s5, %s855
        $region56: #{conv2d_block_forward.1} parent=51 // pred_fallthru
          _
      $region52: #{conv2d_block_forward.1} parent=5 // pred_fallthru
        _
    $region6: #{conv2d_block_forward.1} parent=1 // loop_footer
      %s16 = sadd.s32 1, %s12
    $region7: #{conv2d_block_forward.1} parent=1 // loop_footer_branch
      %11 = sbr.rel target = $region3
    $region8: #{conv2d_block_forward.1} parent=1 // loop_exit
      _
    %857 = vsyncpa [#allocation5], 1
    %s858 = scalar_lea.sflag [#allocation5], 1
    %859 = vsyncpa %s858, 1

</llo_original>
